<compile_context>
chip_gen: v6e
topology: v6e:2x2x1
jax: 0.10.0
libtpu: 0.0.40
codegen_flags: <defaults>
</compile_context>

<pallas_src>
import functools

import jax
import jax.numpy as jnp
from jax.experimental import pallas as pl
from jax.experimental.pallas import tpu as pltpu

_EPS = 1e-5
_DEFAULT_MAX_BLOCK_ELEMS = 512 * 1024          # ~2 MiB of f32 work per block


# ---------------------------------------------------------------------------
# Kernels
# ---------------------------------------------------------------------------
def _bn_single_pass_kernel(*refs, eps, n_total, fold):
    """Whole-batch BN on one (Nf, Ct) channel tile (single HBM pass).

    Refs: x, gamma, beta, [fold_mat], out.  gamma/beta arrive pre-tiled to the
    folded lane layout, fold_mat (Cf, Cf) is the 0/1 fold+broadcast matrix
    (only present when fold > 1, in which case there is a single channel tile).
    """
    if fold > 1:
        x_ref, gamma_ref, beta_ref, fold_ref, o_ref = refs
    else:
        x_ref, gamma_ref, beta_ref, o_ref = refs
        fold_ref = None

    x = x_ref[...].astype(jnp.float32)                     # (Nf, Ct) f32 working copy
    s1 = jnp.sum(x, axis=0, keepdims=True)                 # (1, Ct)  sum(x)
    s2 = jnp.sum(x * x, axis=0, keepdims=True)             # (1, Ct)  sum(x^2)

    if fold_ref is not None:
        # Lanes are [replica r, channel c] -> lane r*C + c.  One tiny matmul
        # both folds the f replica groups and broadcasts the per-channel
        # totals back to every lane (Cf <= 128, single grid step).
        fm = fold_ref[...]
        s1 = jnp.dot(s1, fm, preferred_element_type=jnp.float32)
        s2 = jnp.dot(s2, fm, preferred_element_type=jnp.float32)

    inv_n = 1.0 / n_total
    mean = s1 * inv_n
    var = s2 * inv_n - mean * mean                          # E[x^2] - E[x]^2
    inv_std = jax.lax.rsqrt(var + eps)
    scale = gamma_ref[...] * inv_std                        # (1, Ct) f32
    shift = beta_ref[...] - mean * scale
    # Fused affine; downcast only at the store (f32 math is safe on v5e and
    # hidden under DMA on v6e/v7x for this HBM-bound op).
    o_ref[...] = (x * scale + shift).astype(o_ref.dtype)


def _bn_stats_kernel(x_ref, s1_ref, s2_ref, *, nb, nf):
    """Pass 1 of the large-N fallback: accumulate per-lane sum / sum(x^2)."""
    k = pl.program_id(1)

    @pl.when(k == 0)
    def _():
        s1_ref[...] = jnp.zeros_like(s1_ref)
        s2_ref[...] = jnp.zeros_like(s2_ref)

    x = x_ref[...].astype(jnp.float32)                      # (nb, Ct)
    if nf % nb != 0:
        # Ragged tail block: zero the out-of-bounds rows so they do not
        # contribute to the statistics (n_total is applied at finalize).
        rows = k * nb + jax.lax.broadcasted_iota(jnp.int32, x.shape, 0)
        x = jnp.where(rows < nf, x, 0.0)
    s1_ref[...] += jnp.sum(x, axis=0, keepdims=True)
    s2_ref[...] += jnp.sum(x * x, axis=0, keepdims=True)


def _bn_apply_kernel(x_ref, scale_ref, shift_ref, o_ref):
    """Pass 2 of the large-N fallback: fused affine y = x * scale + shift."""
    x = x_ref[...].astype(jnp.float32)
    o_ref[...] = (x * scale_ref[...] + shift_ref[...]).astype(o_ref.dtype)


# ---------------------------------------------------------------------------
# Planning helpers
# ---------------------------------------------------------------------------
@functools.lru_cache(maxsize=1)
def _vmem_capacity_bytes():
    try:
        return int(pltpu.get_tpu_info().vmem_capacity_bytes)
    except Exception:
        return 64 * 1024 * 1024        # v7x-safe fallback


def _fold_factor(n, c):
    """Largest f with f*C <= 128 and f | N (lane-dense packing of small C)."""
    if c >= 128:
        return 1
    f = max(1, 128 // c)
    while f > 1 and n % f != 0:
        f -= 1
    return f


def _plan_tiles(nf, cf, max_block_elems):
    """Pick (channel_tile, row_tile, two_pass) for a folded (nf, cf) array."""
    if cf % 128 == 0 and cf > 128:
        cands = [d for d in range(128, cf + 1, 128) if cf % d == 0]
    else:
        cands = [cf]          # last dim must be 128-multiple or the full dim

    # Single-pass path: the whole folded batch of a channel tile fits a block.
    fits = [d for d in cands if nf * d <= max_block_elems]
    if fits:
        ct = None
        for min_tiles in (4, 2, 1):   # prefer >=4 tiles (pipeline + v7x TCs)
            ok = [d for d in fits if cf // d >= min_tiles]
            if ok:
                ct = max(ok)
                break
        return ct, nf, False

    # Two-pass fallback (large N): lane-dense channel tile + row tiling.
    if cf % 128 == 0 and cf > 128:
        ct = max(d for d in range(128, min(cf, 512) + 1, 128) if cf % d == 0)
    else:
        ct = cf
    nb = max(8, (max_block_elems // ct) // 8 * 8)
    nb = min(nb, nf)
    return ct, nb, True


def _vmem_limit_bytes(block_elems, itemsize):
    est = 2 * 2 * block_elems * itemsize      # double-buffered in + out blocks
    est += 2 * block_elems * 4                # f32 working copy / temporaries
    est += 64 * 1024                          # params / stats / fold matrix
    limit = 2 * est + (2 << 20)               # headroom for Mosaic scratch
    cap = min(_vmem_capacity_bytes() // 2, 64 << 20)
    return int(min(max(limit, 4 << 20), cap))


# ---------------------------------------------------------------------------
# BatchNorm1d forward (training mode)
# ---------------------------------------------------------------------------
def batchnorm1d_pallas(x, gamma, beta, eps=_EPS, max_block_elems=None):
    """x: (N, C) float array; gamma/beta: (C,) params.  Returns (N, C)."""
    n, c = x.shape
    if max_block_elems is None:
        max_block_elems = _DEFAULT_MAX_BLOCK_ELEMS
    itemsize = jnp.dtype(x.dtype).itemsize

    # Lane-dense folding for small C: (N, C) -> (N/f, f*C), f*C <= 128.
    fold = _fold_factor(n, c)
    nf, cf = n // fold, c * fold
    xf = x.reshape(nf, cf)                     # row-major contiguous -> free

    ct, nb, two_pass = _plan_tiles(nf, cf, max_block_elems)
    num_ct = cf // ct

    gamma_lanes = jnp.tile(gamma.astype(jnp.float32), fold).reshape(1, cf)
    beta_lanes = jnp.tile(beta.astype(jnp.float32), fold).reshape(1, cf)

    if not two_pass:
        # ------------------ single pass over HBM ------------------
        in_specs = [pl.BlockSpec((nf, ct), lambda j: (0, j)),
                    pl.BlockSpec((1, ct), lambda j: (0, j)),
                    pl.BlockSpec((1, ct), lambda j: (0, j))]
        args = [xf, gamma_lanes, beta_lanes]
        if fold > 1:
            lane = jnp.arange(cf, dtype=jnp.int32)
            fold_mat = (lane[:, None] % c == lane[None, :] % c).astype(jnp.float32)
            in_specs.append(pl.BlockSpec((cf, cf), lambda j: (0, 0)))
            args.append(fold_mat)

        limit = _vmem_limit_bytes(nf * ct, itemsize)
        cost = pl.CostEstimate(flops=7 * n * c, transcendentals=c,
                               bytes_accessed=2 * n * c * itemsize + 4 * c * 4)
        yf = pl.pallas_call(
            functools.partial(_bn_single_pass_kernel, eps=eps, n_total=n, fold=fold),
            out_shape=jax.ShapeDtypeStruct((nf, cf), x.dtype),
            grid=(num_ct,),
            in_specs=in_specs,
            out_specs=pl.BlockSpec((nf, ct), lambda j: (0, j)),
            compiler_params=pltpu.CompilerParams(
                dimension_semantics=("parallel",),
                vmem_limit_bytes=limit),
            cost_estimate=cost,
        )(*args)
        return yf.reshape(n, c)

    # ------------------ two-pass fallback for large N ------------------
    num_nt = pl.cdiv(nf, nb)
    limit = _vmem_limit_bytes(nb * ct, itemsize)

    s1, s2 = pl.pallas_call(
        functools.partial(_bn_stats_kernel, nb=nb, nf=nf),
        out_shape=(jax.ShapeDtypeStruct((1, cf), jnp.float32),
                   jax.ShapeDtypeStruct((1, cf), jnp.float32)),
        grid=(num_ct, num_nt),
        in_specs=[pl.BlockSpec((nb, ct), lambda j, k: (k, j))],
        out_specs=(pl.BlockSpec((1, ct), lambda j, k: (0, j)),
                   pl.BlockSpec((1, ct), lambda j, k: (0, j))),
        compiler_params=pltpu.CompilerParams(
            dimension_semantics=("parallel", "arbitrary"),
            vmem_limit_bytes=limit),
        cost_estimate=pl.CostEstimate(flops=3 * n * c, transcendentals=0,
                                      bytes_accessed=n * c * itemsize),
    )(xf)

    # Tiny finalize in plain JAX: fold the replica groups, build per-lane
    # scale / shift (negligible next to the two big passes).
    t1 = s1.reshape(fold, c).sum(axis=0)
    t2 = s2.reshape(fold, c).sum(axis=0)
    mean = t1 / n
    var = t2 / n - mean * mean
    inv_std = jax.lax.rsqrt(var + eps)
    scale = gamma.astype(jnp.float32) * inv_std
    shift = beta.astype(jnp.float32) - mean * scale
    scale_lanes = jnp.tile(scale, fold).reshape(1, cf)
    shift_lanes = jnp.tile(shift, fold).reshape(1, cf)

    yf = pl.pallas_call(
        _bn_apply_kernel,
        out_shape=jax.ShapeDtypeStruct((nf, cf), x.dtype),
        grid=(num_ct, num_nt),
        in_specs=[pl.BlockSpec((nb, ct), lambda j, k: (k, j)),
                  pl.BlockSpec((1, ct), lambda j, k: (0, j)),
                  pl.BlockSpec((1, ct), lambda j, k: (0, j))],
        out_specs=pl.BlockSpec((nb, ct), lambda j, k: (k, j)),
        compiler_params=pltpu.CompilerParams(
            dimension_semantics=("parallel", "parallel"),
            vmem_limit_bytes=limit),
        cost_estimate=pl.CostEstimate(flops=2 * n * c, transcendentals=0,
                                      bytes_accessed=2 * n * c * itemsize),
    )(xf, scale_lanes, shift_lanes)
    return yf.reshape(n, c)


# ---------------------------------------------------------------------------
# WeaveBatchNorm forward
# ---------------------------------------------------------------------------
@functools.partial(jax.jit, static_argnames=("update_pair",))
def _weave_bn_forward(atom_input, pair_input, a_gamma, a_beta, p_gamma, p_beta,
                      update_pair):
    atom_out = batchnorm1d_pallas(atom_input, a_gamma, a_beta)
    if update_pair:
        pair_out = batchnorm1d_pallas(pair_input, p_gamma, p_beta)
    else:
        pair_out = pair_input
    return atom_out, pair_out


class WeaveBatchNormPallas:
    """JAX/Pallas port of WeaveBatchNorm.forward (training-mode BN)."""

    def __init__(self, atom_dim, update_pair, pair_dim, activation=None):
        # `activation` is stored but unused in forward (matches the PyTorch module)
        self.activation = activation
        self.update_pair = update_pair
        # Deterministic init matching nn.BatchNorm1d defaults (gamma=1, beta=0).
        self.a_gamma = jnp.ones((atom_dim,), jnp.float32)
        self.a_beta = jnp.zeros((atom_dim,), jnp.float32)
        self.p_gamma = jnp.ones((pair_dim,), jnp.float32) if update_pair else None
        self.p_beta = jnp.zeros((pair_dim,), jnp.float32) if update_pair else None

    def __call__(self, atom_input, pair_input):
        return _weave_bn_forward(atom_input, pair_input,
                                 self.a_gamma, self.a_beta,
                                 self.p_gamma, self.p_beta,
                                 update_pair=self.update_pair)


# ---------------------------------------------------------------------------
# Reference & self-test
# ---------------------------------------------------------------------------
def _reference_bn(x, gamma, beta, eps=_EPS):
    x32 = x.astype(jnp.float32)
    mean = jnp.mean(x32, axis=0, keepdims=True)
    var = jnp.mean((x32 - mean) ** 2, axis=0, keepdims=True)
    return (x32 - mean) / jnp.sqrt(var + eps) * gamma + beta


if __name__ == "__main__":
    atom_dim, pair_dim = 32, 16
    n_atoms, n_pairs = 8, 8

    key = jax.random.PRNGKey(0)
    k_a, k_p, k1, k2, k3 = jax.random.split(key, 5)
    atom_input = jax.random.normal(k_a, (n_atoms, atom_dim), jnp.float32)
    pair_input = jax.random.normal(k_p, (n_pairs, pair_dim), jnp.float32)

    # Module-level forward (lane-folded single-pass path: C=32 -> f=4, C=16 -> f=8).
    layer = WeaveBatchNormPallas(atom_dim=atom_dim, update_pair=True,
                                 pair_dim=pair_dim)
    atom_out, pair_out = layer(atom_input, pair_input)
    jax.block_until_ready((atom_out, pair_out))

    ref_a = _reference_bn(atom_input, layer.a_gamma, layer.a_beta)
    ref_p = _reference_bn(pair_input, layer.p_gamma, layer.p_beta)
    assert jnp.allclose(atom_out, ref_a, atol=1e-4, rtol=1e-4)
    assert jnp.allclose(pair_out, ref_p, atol=1e-4, rtol=1e-4)

    # update_pair=False passes pair_input through untouched.
    layer_np = WeaveBatchNormPallas(atom_dim=atom_dim, update_pair=False,
                                    pair_dim=pair_dim)
    a2, p2 = layer_np(atom_input, pair_input)
    jax.block_until_ready((a2, p2))
    assert jnp.allclose(a2, ref_a, atol=1e-4, rtol=1e-4)
    assert jnp.allclose(p2, pair_input)

    # Channel-tiled single-pass path (4 lane-dense tiles of 128).
    x_big = jax.random.normal(k1, (64, 512), jnp.float32)
    g_big = jax.random.normal(k2, (512,), jnp.float32) * 0.1 + 1.0
    b_big = jax.random.normal(k3, (512,), jnp.float32) * 0.1
    y_big = batchnorm1d_pallas(x_big, g_big, b_big)
    jax.block_until_ready(y_big)
    assert jnp.allclose(y_big, _reference_bn(x_big, g_big, b_big),
                        atol=1e-4, rtol=1e-4)

    # Two-pass large-N fallback, forced with a tiny block budget; the row
    # count is deliberately not a multiple of the row tile so the ragged-tail
    # masking path is exercised as well.
    x_tall = jax.random.normal(k1, (60, 256), jnp.float32)
    g_t = jnp.ones((256,), jnp.float32)
    b_t = jnp.zeros((256,), jnp.float32)
    y_tall = batchnorm1d_pallas(x_tall, g_t, b_t, max_block_elems=4096)
    jax.block_until_ready(y_tall)
    assert jnp.allclose(y_tall, _reference_bn(x_tall, g_t, b_t),
                        atol=1e-4, rtol=1e-4)

    # bf16 inputs (loose tolerance: bf16 load/store quantization).
    x_bf = jax.random.normal(k2, (32, 32), jnp.float32).astype(jnp.bfloat16)
    y_bf = batchnorm1d_pallas(x_bf, jnp.ones((32,), jnp.float32),
                              jnp.zeros((32,), jnp.float32))
    jax.block_until_ready(y_bf)
    ref_bf = _reference_bn(x_bf.astype(jnp.float32),
                           jnp.ones((32,), jnp.float32),
                           jnp.zeros((32,), jnp.float32))
    assert jnp.allclose(y_bf.astype(jnp.float32), ref_bf, atol=5e-2, rtol=5e-2)

    print("KERNEL_OK")
</pallas_src>

<mosaic_0001>
module attributes {stable_mosaic.version = 11 : i64} {
  func.func @_bn_single_pass_kernel(%arg0: i32, %arg1: memref<2x128xf32, #tpu.memory_space<vmem>>, %arg2: memref<1x128xf32, #tpu.memory_space<vmem>>, %arg3: memref<1x128xf32, #tpu.memory_space<vmem>>, %arg4: memref<128x128xf32, #tpu.memory_space<vmem>>, %arg5: memref<2x128xf32, #tpu.memory_space<vmem>>) attributes {dimension_semantics = [#tpu.dimension_semantics<parallel>], iteration_bounds = array<i64: 1>, scalar_prefetch = 0 : i64, scratch_operands = 0 : i64, tpu.core_type = #tpu.core_type<tc>, window_params = [{transform_indices = @transform_0, window_bounds = array<i64: 2, 128>}, {transform_indices = @transform_1, window_bounds = array<i64: 1, 128>}, {transform_indices = @transform_2, window_bounds = array<i64: 1, 128>}, {pipeline_mode = #tpu.pipeline_mode<synchronous>, transform_indices = @transform_3, window_bounds = array<i64: 128, 128>}, {transform_indices = @transform_4, window_bounds = array<i64: 2, 128>}]} {
    %c0 = arith.constant 0 : index
    %c0_0 = arith.constant 0 : index
    %0 = vector.load %arg1[%c0, %c0_0] : memref<2x128xf32, #tpu.memory_space<vmem>>, vector<2x128xf32>
    %cst = arith.constant dense<0.000000e+00> : vector<128xf32>
    %1 = vector.multi_reduction <add>, %0, %cst [0] : vector<2x128xf32> to vector<128xf32>
    %2 = vector.shape_cast %1 : vector<128xf32> to vector<1x128xf32>
    %3 = arith.mulf %0, %0 : vector<2x128xf32>
    %cst_1 = arith.constant dense<0.000000e+00> : vector<128xf32>
    %4 = vector.multi_reduction <add>, %3, %cst_1 [0] : vector<2x128xf32> to vector<128xf32>
    %5 = vector.shape_cast %4 : vector<128xf32> to vector<1x128xf32>
    %c0_2 = arith.constant 0 : index
    %c0_3 = arith.constant 0 : index
    %6 = vector.load %arg4[%c0_2, %c0_3] : memref<128x128xf32, #tpu.memory_space<vmem>>, vector<128x128xf32>
    %cst_4 = arith.constant dense<0.000000e+00> : vector<1x128xf32>
    %7 = tpu.matmul %2, %6, %cst_4 {dimension_numbers = #tpu.dot_dimension_numbers<[1], [0], [0], [1], [0, 0, 1, 1], [], []>} : vector<1x128xf32>, vector<128x128xf32>, vector<1x128xf32> -> vector<1x128xf32>
    %cst_5 = arith.constant dense<0.000000e+00> : vector<1x128xf32>
    %8 = tpu.matmul %5, %6, %cst_5 {dimension_numbers = #tpu.dot_dimension_numbers<[1], [0], [0], [1], [0, 0, 1, 1], [], []>} : vector<1x128xf32>, vector<128x128xf32>, vector<1x128xf32> -> vector<1x128xf32>
    %cst_6 = arith.constant 1.250000e-01 : f32
    %9 = vector.broadcast %cst_6 : f32 to vector<1x128xf32>
    %10 = arith.mulf %7, %9 : vector<1x128xf32>
    %cst_7 = arith.constant 1.250000e-01 : f32
    %11 = vector.broadcast %cst_7 : f32 to vector<1x128xf32>
    %12 = arith.mulf %8, %11 : vector<1x128xf32>
    %13 = arith.mulf %10, %10 : vector<1x128xf32>
    %14 = arith.subf %12, %13 : vector<1x128xf32>
    %cst_8 = arith.constant 9.99999974E-6 : f32
    %15 = vector.broadcast %cst_8 : f32 to vector<1x128xf32>
    %16 = arith.addf %14, %15 : vector<1x128xf32>
    %17 = math.rsqrt %16 : vector<1x128xf32>
    %c0_9 = arith.constant 0 : index
    %c0_10 = arith.constant 0 : index
    %18 = vector.load %arg2[%c0_9, %c0_10] : memref<1x128xf32, #tpu.memory_space<vmem>>, vector<1x128xf32>
    %19 = arith.mulf %18, %17 : vector<1x128xf32>
    %c0_11 = arith.constant 0 : index
    %c0_12 = arith.constant 0 : index
    %20 = vector.load %arg3[%c0_11, %c0_12] : memref<1x128xf32, #tpu.memory_space<vmem>>, vector<1x128xf32>
    %21 = arith.mulf %10, %19 : vector<1x128xf32>
    %22 = arith.subf %20, %21 : vector<1x128xf32>
    %23 = vector.broadcast %19 : vector<1x128xf32> to vector<2x128xf32>
    %24 = arith.mulf %0, %23 : vector<2x128xf32>
    %25 = vector.broadcast %22 : vector<1x128xf32> to vector<2x128xf32>
    %26 = arith.addf %24, %25 : vector<2x128xf32>
    %c0_13 = arith.constant 0 : index
    %c0_14 = arith.constant 0 : index
    %27 = vector.load %arg5[%c0_13, %c0_14] : memref<2x128xf32, #tpu.memory_space<vmem>>, vector<2x128xf32>
    tpu.vector_store %arg5[%c0_13, %c0_14], %26 {strides = array<i32>} : memref<2x128xf32, #tpu.memory_space<vmem>>, vector<2x128xf32>,
    return
  }
  func.func @transform_0(%arg0: i32) -> (i32, i32) {
    %c0_i32 = arith.constant 0 : i32
    %c0_i32_0 = arith.constant 0 : i32
    return %c0_i32, %arg0 : i32, i32
  }
  func.func @transform_1(%arg0: i32) -> (i32, i32) {
    %c0_i32 = arith.constant 0 : i32
    %c0_i32_0 = arith.constant 0 : i32
    return %c0_i32, %arg0 : i32, i32
  }
  func.func @transform_2(%arg0: i32) -> (i32, i32) {
    %c0_i32 = arith.constant 0 : i32
    %c0_i32_0 = arith.constant 0 : i32
    return %c0_i32, %arg0 : i32, i32
  }
  func.func @transform_3(%arg0: i32) -> (i32, i32) {
    %c0_i32 = arith.constant 0 : i32
    %c0_i32_0 = arith.constant 0 : i32
    %c0_i32_1 = arith.constant 0 : i32
    return %c0_i32, %c0_i32_0 : i32, i32
  }
  func.func @transform_4(%arg0: i32) -> (i32, i32) {
    %c0_i32 = arith.constant 0 : i32
    %c0_i32_0 = arith.constant 0 : i32
    return %c0_i32, %arg0 : i32, i32
  }
}

module attributes {stable_mosaic.version = 11 : i64} {
  func.func @_bn_single_pass_kernel(%arg0: i32, %arg1: memref<1x128xf32, #tpu.memory_space<vmem>>, %arg2: memref<1x128xf32, #tpu.memory_space<vmem>>, %arg3: memref<1x128xf32, #tpu.memory_space<vmem>>, %arg4: memref<128x128xf32, #tpu.memory_space<vmem>>, %arg5: memref<1x128xf32, #tpu.memory_space<vmem>>) attributes {dimension_semantics = [#tpu.dimension_semantics<parallel>], iteration_bounds = array<i64: 1>, scalar_prefetch = 0 : i64, scratch_operands = 0 : i64, tpu.core_type = #tpu.core_type<tc>, window_params = [{transform_indices = @transform_0, window_bounds = array<i64: 1, 128>}, {transform_indices = @transform_1, window_bounds = array<i64: 1, 128>}, {transform_indices = @transform_2, window_bounds = array<i64: 1, 128>}, {pipeline_mode = #tpu.pipeline_mode<synchronous>, transform_indices = @transform_3, window_bounds = array<i64: 128, 128>}, {transform_indices = @transform_4, window_bounds = array<i64: 1, 128>}]} {
    %c0 = arith.constant 0 : index
    %c0_0 = arith.constant 0 : index
    %0 = vector.load %arg1[%c0, %c0_0] : memref<1x128xf32, #tpu.memory_space<vmem>>, vector<1x128xf32>
    %cst = arith.constant dense<0.000000e+00> : vector<128xf32>
    %1 = vector.multi_reduction <add>, %0, %cst [0] : vector<1x128xf32> to vector<128xf32>
    %2 = vector.shape_cast %1 : vector<128xf32> to vector<1x128xf32>
    %3 = arith.mulf %0, %0 : vector<1x128xf32>
    %cst_1 = arith.constant dense<0.000000e+00> : vector<128xf32>
    %4 = vector.multi_reduction <add>, %3, %cst_1 [0] : vector<1x128xf32> to vector<128xf32>
    %5 = vector.shape_cast %4 : vector<128xf32> to vector<1x128xf32>
    %c0_2 = arith.constant 0 : index
    %c0_3 = arith.constant 0 : index
    %6 = vector.load %arg4[%c0_2, %c0_3] : memref<128x128xf32, #tpu.memory_space<vmem>>, vector<128x128xf32>
    %cst_4 = arith.constant dense<0.000000e+00> : vector<1x128xf32>
    %7 = tpu.matmul %2, %6, %cst_4 {dimension_numbers = #tpu.dot_dimension_numbers<[1], [0], [0], [1], [0, 0, 1, 1], [], []>} : vector<1x128xf32>, vector<128x128xf32>, vector<1x128xf32> -> vector<1x128xf32>
    %cst_5 = arith.constant dense<0.000000e+00> : vector<1x128xf32>
    %8 = tpu.matmul %5, %6, %cst_5 {dimension_numbers = #tpu.dot_dimension_numbers<[1], [0], [0], [1], [0, 0, 1, 1], [], []>} : vector<1x128xf32>, vector<128x128xf32>, vector<1x128xf32> -> vector<1x128xf32>
    %cst_6 = arith.constant 1.250000e-01 : f32
    %9 = vector.broadcast %cst_6 : f32 to vector<1x128xf32>
    %10 = arith.mulf %7, %9 : vector<1x128xf32>
    %cst_7 = arith.constant 1.250000e-01 : f32
    %11 = vector.broadcast %cst_7 : f32 to vector<1x128xf32>
    %12 = arith.mulf %8, %11 : vector<1x128xf32>
    %13 = arith.mulf %10, %10 : vector<1x128xf32>
    %14 = arith.subf %12, %13 : vector<1x128xf32>
    %cst_8 = arith.constant 9.99999974E-6 : f32
    %15 = vector.broadcast %cst_8 : f32 to vector<1x128xf32>
    %16 = arith.addf %14, %15 : vector<1x128xf32>
    %17 = math.rsqrt %16 : vector<1x128xf32>
    %c0_9 = arith.constant 0 : index
    %c0_10 = arith.constant 0 : index
    %18 = vector.load %arg2[%c0_9, %c0_10] : memref<1x128xf32, #tpu.memory_space<vmem>>, vector<1x128xf32>
    %19 = arith.mulf %18, %17 : vector<1x128xf32>
    %c0_11 = arith.constant 0 : index
    %c0_12 = arith.constant 0 : index
    %20 = vector.load %arg3[%c0_11, %c0_12] : memref<1x128xf32, #tpu.memory_space<vmem>>, vector<1x128xf32>
    %21 = arith.mulf %10, %19 : vector<1x128xf32>
    %22 = arith.subf %20, %21 : vector<1x128xf32>
    %23 = arith.mulf %0, %19 : vector<1x128xf32>
    %24 = arith.addf %23, %22 : vector<1x128xf32>
    %c0_13 = arith.constant 0 : index
    %c0_14 = arith.constant 0 : index
    %25 = vector.load %arg5[%c0_13, %c0_14] : memref<1x128xf32, #tpu.memory_space<vmem>>, vector<1x128xf32>
    tpu.vector_store %arg5[%c0_13, %c0_14], %24 {strides = array<i32>} : memref<1x128xf32, #tpu.memory_space<vmem>>, vector<1x128xf32>,
    return
  }
  func.func @transform_0(%arg0: i32) -> (i32, i32) {
    %c0_i32 = arith.constant 0 : i32
    %c0_i32_0 = arith.constant 0 : i32
    return %c0_i32, %arg0 : i32, i32
  }
  func.func @transform_1(%arg0: i32) -> (i32, i32) {
    %c0_i32 = arith.constant 0 : i32
    %c0_i32_0 = arith.constant 0 : i32
    return %c0_i32, %arg0 : i32, i32
  }
  func.func @transform_2(%arg0: i32) -> (i32, i32) {
    %c0_i32 = arith.constant 0 : i32
    %c0_i32_0 = arith.constant 0 : i32
    return %c0_i32, %arg0 : i32, i32
  }
  func.func @transform_3(%arg0: i32) -> (i32, i32) {
    %c0_i32 = arith.constant 0 : i32
    %c0_i32_0 = arith.constant 0 : i32
    %c0_i32_1 = arith.constant 0 : i32
    return %c0_i32, %c0_i32_0 : i32, i32
  }
  func.func @transform_4(%arg0: i32) -> (i32, i32) {
    %c0_i32 = arith.constant 0 : i32
    %c0_i32_0 = arith.constant 0 : i32
    return %c0_i32, %arg0 : i32, i32
  }
}

</mosaic_0001>

<llo_original>
// kernel: tile.24
$region0: #{tile.24}
  %s0 = inlined_call_operand.vmem [shape: f32[4,32], index: 0, kind: input, shape index: {}]
  %s1 = inlined_call_operand.vmem [shape: f32[1,128], index: 1, kind: output, shape index: {}]
  $region1: #{tile.24} parent=0
    #allocation0 [shape = 'u8[4096]{0}', space=vmem, size = 0x1000, scoped, tag = 'scoped mem for output reshape']
    #allocation1 [shape = 'u8[4096]{0}', space=vmem, size = 0x1000, scoped, tag = 'scoped mem for input reshape']
    %s3 = sshll.u32 1, 4
    %s4 = ssub.s32 %s3, 1
    %v5 = vld [vmem:[%s0] sm:%s4]
    %6 = vst [vmem:[#allocation1] sm:%s4] %v5
    %v7 = vld [vmem:[#allocation1] sm:$0x1]
    %vm8 = vcmask 261120
    %9 = vst.msk [vmem:[#allocation0] sm:$0x1] %vm8, %v7
    %s10 = scalar_lea.vmem [#allocation1], 3
    %v11 = vld [vmem:[%s10] sm:$0x1]
    %12 = vrot.lane.b32.xlu0 %v11, 96
    %v13 = vpop.permute.xlu0 %12
    %vm14 = vcmask 1048320
    %15 = vst.msk [vmem:[#allocation0] sm:$0x1] %vm14, %v13
    %s16 = scalar_lea.vmem [#allocation1], 2
    %v17 = vld [vmem:[%s16] sm:$0x1]
    %18 = vrot.lane.b32.xlu0 %v17, 64
    %v19 = vpop.permute.xlu0 %18
    %vm20 = vcmask 785920
    %21 = vst.msk [vmem:[#allocation0] sm:$0x1] %vm20, %v19
    %s22 = scalar_lea.vmem [#allocation1], 1
    %v23 = vld [vmem:[%s22] sm:$0x1]
    %24 = vrot.lane.b32.xlu0 %v23, 32
    %v25 = vpop.permute.xlu0 %24
    %vm26 = vcmask 523520
    %27 = vst.msk [vmem:[#allocation0] sm:$0x1] %vm26, %v25
    %s29 = sshll.u32 1, 1
    %s30 = ssub.s32 %s29, 1
    %v32 = vld [vmem:[#allocation0] sm:%s30]
    %s33 = sshll.u32 1, 1
    %s34 = ssub.s32 %s33, 1
    %35 = vst [vmem:[%s1] sm:%s34] %v32

// kernel: tile.23
$region0: #{tile.23}
  #allocation0 [shape = 's32[1]{0}', space=sflag, size = 0x4, scoped, tag = 'scoped memory for tile.23']
  %s0 = inlined_call_operand.vmem [shape: f32[32], index: 0, kind: input, shape index: {}]
  %s1 = inlined_call_operand.vmem [shape: f32[4,32], index: 1, kind: output, shape index: {}]
  // Predicated region
  $region2: #{tile.23} parent=0 // pred_check
    _
  $region3: #{tile.23} parent=0 // pred_check_branch
    %3 = sbr.rel (0) target = $region5
  $region4: #{tile.23} parent=0 // pred_region
    _
  $region5: #{tile.23} parent=0 // pred_fallthru
    _
  %v4 = vld [vmem:[%s0] ss:$0 sm:$0xff]
  %5 = vst [vmem:[%s1] sm:$0xf] %v4

// kernel: tile.33
$region0: #{tile.33}
  #allocation0 [shape = 's32[1]{0}', space=sflag, size = 0x4, scoped, tag = 'scoped memory for tile.33']
  %s0 = inlined_call_operand.vmem [shape: f32[16], index: 0, kind: input, shape index: {}]
  %s1 = inlined_call_operand.vmem [shape: f32[8,16], index: 1, kind: output, shape index: {}]
  // Predicated region
  $region2: #{tile.33} parent=0 // pred_check
    _
  $region3: #{tile.33} parent=0 // pred_check_branch
    %3 = sbr.rel (0) target = $region5
  $region4: #{tile.33} parent=0 // pred_region
    _
  $region5: #{tile.33} parent=0 // pred_fallthru
    _
  %v4 = vld [vmem:[%s0] ss:$0 sm:$0xff]
  %5 = vst [vmem:[%s1] sm:$0xff] %v4

// kernel: _weave_bn_forward.2
$region0: #{_weave_bn_forward.2}
  #allocation0 [shape = 'u32[]', space=smem, size = 0x4, offset = 0x4, fixed_abs, tag = 'smem constant byte address 0x4 - core index']
  #allocation1 [shape = 'u32[144,128]{1,0:T(1,128)}', space=vmem, size = 0x12000, scoped, tag = 'internal scratch']
  %s0 = inlined_call_operand.vmem [shape: f32[2,128], index: 0, kind: input, shape index: {}]
  %s1 = inlined_call_operand.vmem [shape: f32[1,128], index: 1, kind: input, shape index: {}]
  %s2 = inlined_call_operand.vmem [shape: f32[1,128], index: 2, kind: input, shape index: {}]
  %s3 = inlined_call_operand.vmem [shape: f32[128,128], index: 3, kind: input, shape index: {}]
  %s4 = inlined_call_operand.vmem [shape: f32[2,128], index: 4, kind: output, shape index: {}]
  %s5 = sld [smem:[#allocation0]]
  $region26: #{_weave_bn_forward.2} parent=0
    _
  %s7 = ssub.s32 1, %s5
  %s8 = scalar_select 0, %s7, %s5
  // Predicated region
  $region2: #{_weave_bn_forward.2} parent=0 // pred_check
    _
  $region3: #{_weave_bn_forward.2} parent=0 // pred_check_branch
    %10 = sbr.rel (0) target = $region5
  $region4: #{_weave_bn_forward.2} parent=0 // pred_region
    _
  $region5: #{_weave_bn_forward.2} parent=0 // pred_fallthru
    _
  // Predicated region
  $region6: #{_weave_bn_forward.2} parent=0 // pred_check
    _
  $region7: #{_weave_bn_forward.2} parent=0 // pred_check_branch
    %12 = sbr.rel (0) target = $region9
  $region8: #{_weave_bn_forward.2} parent=0 // pred_region
    _
  $region9: #{_weave_bn_forward.2} parent=0 // pred_fallthru
    _
  // Predicated region
  $region10: #{_weave_bn_forward.2} parent=0 // pred_check
    _
  $region11: #{_weave_bn_forward.2} parent=0 // pred_check_branch
    %14 = sbr.rel (0) target = $region13
  $region12: #{_weave_bn_forward.2} parent=0 // pred_region
    _
  $region13: #{_weave_bn_forward.2} parent=0 // pred_fallthru
    _
  // Predicated region
  $region14: #{_weave_bn_forward.2} parent=0 // pred_check
    _
  $region15: #{_weave_bn_forward.2} parent=0 // pred_check_branch
    %16 = sbr.rel (0) target = $region17
  $region16: #{_weave_bn_forward.2} parent=0 // pred_region
    _
  $region17: #{_weave_bn_forward.2} parent=0 // pred_fallthru
    _
  %v17 = vld [vmem:[%s0] sm:$0x3]
  %vm18 = vcmask 1041408
  %v19 = vsel %vm18, %v17, 0.0
  %v20 = vrot.slane %v19, 4
  %v21 = vadd.f32 %v19, %v20
  %v22 = vrot.slane %v21, 2
  %v23 = vadd.f32 %v21, %v22
  %v24 = vrot.slane %v23, 1
  %v25 = vadd.f32 %v23, %v24
  %v26 = vmul.f32 %v17, %v17
  %v27 = vsel %vm18, %v26, 0.0
  %v28 = vrot.slane %v27, 4
  %v29 = vadd.f32 %v27, %v28
  %v30 = vrot.slane %v29, 2
  %v31 = vadd.f32 %v29, %v30
  %v32 = vrot.slane %v31, 1
  %v33 = vadd.f32 %v31, %v32
  %v34 = vld [vmem:[%s3] sm:$0xff]
  %v35 = vld [vmem:[%s3 + $0x8] sm:$0xff]
  %v36 = vld [vmem:[%s3 + $0x10] sm:$0xff]
  %v37 = vld [vmem:[%s3 + $0x18] sm:$0xff]
  %v38 = vld [vmem:[%s3 + $0x20] sm:$0xff]
  %v39 = vld [vmem:[%s3 + $0x28] sm:$0xff]
  %v40 = vld [vmem:[%s3 + $0x30] sm:$0xff]
  %v41 = vld [vmem:[%s3 + $0x38] sm:$0xff]
  %v42 = vld [vmem:[%s3 + $0x40] sm:$0xff]
  %v43 = vld [vmem:[%s3 + $0x48] sm:$0xff]
  %v44 = vld [vmem:[%s3 + $0x50] sm:$0xff]
  %v45 = vld [vmem:[%s3 + $0x58] sm:$0xff]
  %v46 = vld [vmem:[%s3 + $0x60] sm:$0xff]
  %v47 = vld [vmem:[%s3 + $0x68] sm:$0xff]
  %v48 = vld [vmem:[%s3 + $0x70] sm:$0xff]
  %v49 = vld [vmem:[%s3 + $0x78] sm:$0xff]
  %50 = vmatprep.subr.mxu0 0.0
  %51 = vmatpush1.msra.mxu0 %v49
  %52 = vmatprep.subr.mxu0 0.0
  %53 = vmatpush1.msra.mxu0 %v48
  %54 = vmatprep.subr.mxu0 0.0
  %55 = vmatpush1.msra.mxu0 %v47
  %56 = vmatprep.subr.mxu0 0.0
  %57 = vmatpush1.msra.mxu0 %v46
  %58 = vmatprep.subr.mxu0 0.0
  %59 = vmatpush1.msra.mxu0 %v45
  %60 = vmatprep.subr.mxu0 0.0
  %61 = vmatpush1.msra.mxu0 %v44
  %62 = vmatprep.subr.mxu0 0.0
  %63 = vmatpush1.msra.mxu0 %v43
  %64 = vmatprep.subr.mxu0 0.0
  %65 = vmatpush1.msra.mxu0 %v42
  %66 = vmatprep.subr.mxu0 0.0
  %67 = vmatpush1.msra.mxu0 %v41
  %68 = vmatprep.subr.mxu0 0.0
  %69 = vmatpush1.msra.mxu0 %v40
  %70 = vmatprep.subr.mxu0 0.0
  %71 = vmatpush1.msra.mxu0 %v39
  %72 = vmatprep.subr.mxu0 0.0
  %73 = vmatpush1.msra.mxu0 %v38
  %74 = vmatprep.subr.mxu0 0.0
  %75 = vmatpush1.msra.mxu0 %v37
  %76 = vmatprep.subr.mxu0 0.0
  %77 = vmatpush1.msra.mxu0 %v36
  %78 = vmatprep.subr.mxu0 0.0
  %79 = vmatpush1.msra.mxu0 %v35
  %80 = vmatprep.subr.mxu0 0.0
  %81 = vmatpush1.msra.mxu0 %v34
  %82 = vmatprep.subr.mxu0 0.0
  %83 = vmatpush2.msra.mxu0 0.0
  %84 = vmatprep.subr.mxu0 0.0
  %85 = vmatpush2.msra.mxu0 0.0
  %86 = vmatprep.subr.mxu0 0.0
  %87 = vmatpush2.msra.mxu0 0.0
  %88 = vmatprep.subr.mxu0 0.0
  %89 = vmatpush2.msra.mxu0 0.0
  %90 = vmatprep.subr.mxu0 0.0
  %91 = vmatpush2.msra.mxu0 0.0
  %92 = vmatprep.subr.mxu0 0.0
  %93 = vmatpush2.msra.mxu0 0.0
  %94 = vmatprep.subr.mxu0 0.0
  %95 = vmatpush2.msra.mxu0 0.0
  %96 = vmatprep.subr.mxu0 0.0
  %97 = vmatpush2.msra.mxu0 0.0
  %98 = vmatprep.subr.mxu0 0.0
  %99 = vmatpush2.msra.mxu0 0.0
  %100 = vmatprep.subr.mxu0 0.0
  %101 = vmatpush2.msra.mxu0 0.0
  %102 = vmatprep.subr.mxu0 0.0
  %103 = vmatpush2.msra.mxu0 0.0
  %104 = vmatprep.subr.mxu0 0.0
  %105 = vmatpush2.msra.mxu0 0.0
  %106 = vmatprep.subr.mxu0 0.0
  %107 = vmatpush2.msra.mxu0 0.0
  %108 = vmatprep.subr.mxu0 0.0
  %109 = vmatpush2.msra.mxu0 0.0
  %110 = vmatprep.subr.mxu0 0.0
  %111 = vmatpush2.msra.mxu0 0.0
  %112 = vmatprep.subr.mxu0 0.0
  %113 = vmatpush2.msra.mxu0 0.0
  %114 = vmatprep.mubr.f32.mxu0 0.0
  %115 = vmatmul.mubr.f32.gmra.mxu0 %v25
  %v116 = vpop.f32.mrf.mxu0
  %v117 = vadd.f32 0.0, %v116
  %v118 = vpop.f32.mrf.mxu0
  %119 = vdwg.mxu0
  %120 = vmatprep.subr.mxu0 0.0
  %121 = vmatpush1.msra.mxu0 %v49
  %122 = vmatprep.subr.mxu0 0.0
  %123 = vmatpush1.msra.mxu0 %v48
  %124 = vmatprep.subr.mxu0 0.0
  %125 = vmatpush1.msra.mxu0 %v47
  %126 = vmatprep.subr.mxu0 0.0
  %127 = vmatpush1.msra.mxu0 %v46
  %128 = vmatprep.subr.mxu0 0.0
  %129 = vmatpush1.msra.mxu0 %v45
  %130 = vmatprep.subr.mxu0 0.0
  %131 = vmatpush1.msra.mxu0 %v44
  %132 = vmatprep.subr.mxu0 0.0
  %133 = vmatpush1.msra.mxu0 %v43
  %134 = vmatprep.subr.mxu0 0.0
  %135 = vmatpush1.msra.mxu0 %v42
  %136 = vmatprep.subr.mxu0 0.0
  %137 = vmatpush1.msra.mxu0 %v41
  %138 = vmatprep.subr.mxu0 0.0
  %139 = vmatpush1.msra.mxu0 %v40
  %140 = vmatprep.subr.mxu0 0.0
  %141 = vmatpush1.msra.mxu0 %v39
  %142 = vmatprep.subr.mxu0 0.0
  %143 = vmatpush1.msra.mxu0 %v38
  %144 = vmatprep.subr.mxu0 0.0
  %145 = vmatpush1.msra.mxu0 %v37
  %146 = vmatprep.subr.mxu0 0.0
  %147 = vmatpush1.msra.mxu0 %v36
  %148 = vmatprep.subr.mxu0 0.0
  %149 = vmatpush1.msra.mxu0 %v35
  %150 = vmatprep.subr.mxu0 0.0
  %151 = vmatpush1.msra.mxu0 %v34
  %152 = vmatprep.subr.mxu0 0.0
  %153 = vmatpush2.msra.mxu0 0.0
  %154 = vmatprep.subr.mxu0 0.0
  %155 = vmatpush2.msra.mxu0 0.0
  %156 = vmatprep.subr.mxu0 0.0
  %157 = vmatpush2.msra.mxu0 0.0
  %158 = vmatprep.subr.mxu0 0.0
  %159 = vmatpush2.msra.mxu0 0.0
  %160 = vmatprep.subr.mxu0 0.0
  %161 = vmatpush2.msra.mxu0 0.0
  %162 = vmatprep.subr.mxu0 0.0
  %163 = vmatpush2.msra.mxu0 0.0
  %164 = vmatprep.subr.mxu0 0.0
  %165 = vmatpush2.msra.mxu0 0.0
  %166 = vmatprep.subr.mxu0 0.0
  %167 = vmatpush2.msra.mxu0 0.0
  %168 = vmatprep.subr.mxu0 0.0
  %169 = vmatpush2.msra.mxu0 0.0
  %170 = vmatprep.subr.mxu0 0.0
  %171 = vmatpush2.msra.mxu0 0.0
  %172 = vmatprep.subr.mxu0 0.0
  %173 = vmatpush2.msra.mxu0 0.0
  %174 = vmatprep.subr.mxu0 0.0
  %175 = vmatpush2.msra.mxu0 0.0
  %176 = vmatprep.subr.mxu0 0.0
  %177 = vmatpush2.msra.mxu0 0.0
  %178 = vmatprep.subr.mxu0 0.0
  %179 = vmatpush2.msra.mxu0 0.0
  %180 = vmatprep.subr.mxu0 0.0
  %181 = vmatpush2.msra.mxu0 0.0
  %182 = vmatprep.subr.mxu0 0.0
  %183 = vmatpush2.msra.mxu0 0.0
  %184 = vmatprep.mubr.f32.mxu0 0.0
  %185 = vmatmul.mubr.f32.gmra.mxu0 %v33
  %v186 = vpop.f32.mrf.mxu0
  %v187 = vadd.f32 0.0, %v186
  %v188 = vpop.f32.mrf.mxu0
  %189 = vdwg.mxu0
  %v190 = vmul.f32 %v117, 0.125
  %v191 = vmul.f32 %v187, 0.125
  %v192 = vmul.f32 %v190, %v190
  %v193 = vsub.f32 %v191, %v192
  %v194 = vadd.f32 %v193, 1e-05
  %v195 = vrsqrt.pop %v194
  %v196 = vld [vmem:[%s1] sm:$0x1]
  %v197 = vmul.f32 %v196, %v195
  %v198 = vld [vmem:[%s2] sm:$0x1]
  %v199 = vmul.f32 %v190, %v197
  %v200 = vsub.f32 %v198, %v199
  %v202 = vlaneseq
  %v203 = vshrl.u32 %v202, 7
  %v204 = vsub.s32 0, %v203
  %v205 = vrot.slane %v197, %v204
  %v207 = vmul.f32 %v17, %v205
  %v209 = vlaneseq
  %v210 = vshrl.u32 %v209, 7
  %v211 = vsub.s32 0, %v210
  %v212 = vrot.slane %v200, %v211
  %v214 = vadd.f32 %v207, %v212
  %215 = vst [vmem:[%s4] sm:$0x3] %v214
  // Predicated region
  $region18: #{_weave_bn_forward.2} parent=0 // pred_check
    _
  $region19: #{_weave_bn_forward.2} parent=0 // pred_check_branch
    %217 = sbr.rel (0) target = $region21
  $region20: #{_weave_bn_forward.2} parent=0 // pred_region
    _
  $region21: #{_weave_bn_forward.2} parent=0 // pred_fallthru
    _
  // Predicated region
  $region22: #{_weave_bn_forward.2} parent=0 // pred_check
    _
  $region23: #{_weave_bn_forward.2} parent=0 // pred_check_branch
    %219 = sbr.rel (0) target = $region25
  $region24: #{_weave_bn_forward.2} parent=0 // pred_region
    _
  $region25: #{_weave_bn_forward.2} parent=0 // pred_fallthru
    _

// kernel: _weave_bn_forward.3
$region0: #{_weave_bn_forward.3}
  #allocation0 [shape = 'u32[]', space=smem, size = 0x4, offset = 0x4, fixed_abs, tag = 'smem constant byte address 0x4 - core index']
  #allocation1 [shape = 'u32[144,128]{1,0:T(1,128)}', space=vmem, size = 0x12000, scoped, tag = 'internal scratch']
  %s0 = inlined_call_operand.vmem [shape: f32[1,128], index: 0, kind: input, shape index: {}]
  %s1 = inlined_call_operand.vmem [shape: f32[1,128], index: 1, kind: input, shape index: {}]
  %s2 = inlined_call_operand.vmem [shape: f32[1,128], index: 2, kind: input, shape index: {}]
  %s3 = inlined_call_operand.vmem [shape: f32[128,128], index: 3, kind: input, shape index: {}]
  %s4 = inlined_call_operand.vmem [shape: f32[1,128], index: 4, kind: output, shape index: {}]
  %s5 = sld [smem:[#allocation0]]
  $region26: #{_weave_bn_forward.3} parent=0
    _
  %s7 = ssub.s32 1, %s5
  %s8 = scalar_select 0, %s7, %s5
  // Predicated region
  $region2: #{_weave_bn_forward.3} parent=0 // pred_check
    _
  $region3: #{_weave_bn_forward.3} parent=0 // pred_check_branch
    %10 = sbr.rel (0) target = $region5
  $region4: #{_weave_bn_forward.3} parent=0 // pred_region
    _
  $region5: #{_weave_bn_forward.3} parent=0 // pred_fallthru
    _
  // Predicated region
  $region6: #{_weave_bn_forward.3} parent=0 // pred_check
    _
  $region7: #{_weave_bn_forward.3} parent=0 // pred_check_branch
    %12 = sbr.rel (0) target = $region9
  $region8: #{_weave_bn_forward.3} parent=0 // pred_region
    _
  $region9: #{_weave_bn_forward.3} parent=0 // pred_fallthru
    _
  // Predicated region
  $region10: #{_weave_bn_forward.3} parent=0 // pred_check
    _
  $region11: #{_weave_bn_forward.3} parent=0 // pred_check_branch
    %14 = sbr.rel (0) target = $region13
  $region12: #{_weave_bn_forward.3} parent=0 // pred_region
    _
  $region13: #{_weave_bn_forward.3} parent=0 // pred_fallthru
    _
  // Predicated region
  $region14: #{_weave_bn_forward.3} parent=0 // pred_check
    _
  $region15: #{_weave_bn_forward.3} parent=0 // pred_check_branch
    %16 = sbr.rel (0) target = $region17
  $region16: #{_weave_bn_forward.3} parent=0 // pred_region
    _
  $region17: #{_weave_bn_forward.3} parent=0 // pred_fallthru
    _
  %v17 = vld [vmem:[%s0] sm:$0x1]
  %v18 = vadd.f32 %v17, 0.0
  %v19 = vmul.f32 %v17, %v17
  %v20 = vadd.f32 %v19, 0.0
  %v21 = vld [vmem:[%s3] sm:$0xff]
  %v22 = vld [vmem:[%s3 + $0x8] sm:$0xff]
  %v23 = vld [vmem:[%s3 + $0x10] sm:$0xff]
  %v24 = vld [vmem:[%s3 + $0x18] sm:$0xff]
  %v25 = vld [vmem:[%s3 + $0x20] sm:$0xff]
  %v26 = vld [vmem:[%s3 + $0x28] sm:$0xff]
  %v27 = vld [vmem:[%s3 + $0x30] sm:$0xff]
  %v28 = vld [vmem:[%s3 + $0x38] sm:$0xff]
  %v29 = vld [vmem:[%s3 + $0x40] sm:$0xff]
  %v30 = vld [vmem:[%s3 + $0x48] sm:$0xff]
  %v31 = vld [vmem:[%s3 + $0x50] sm:$0xff]
  %v32 = vld [vmem:[%s3 + $0x58] sm:$0xff]
  %v33 = vld [vmem:[%s3 + $0x60] sm:$0xff]
  %v34 = vld [vmem:[%s3 + $0x68] sm:$0xff]
  %v35 = vld [vmem:[%s3 + $0x70] sm:$0xff]
  %v36 = vld [vmem:[%s3 + $0x78] sm:$0xff]
  %37 = vmatprep.subr.mxu0 0.0
  %38 = vmatpush1.msra.mxu0 %v36
  %39 = vmatprep.subr.mxu0 0.0
  %40 = vmatpush1.msra.mxu0 %v35
  %41 = vmatprep.subr.mxu0 0.0
  %42 = vmatpush1.msra.mxu0 %v34
  %43 = vmatprep.subr.mxu0 0.0
  %44 = vmatpush1.msra.mxu0 %v33
  %45 = vmatprep.subr.mxu0 0.0
  %46 = vmatpush1.msra.mxu0 %v32
  %47 = vmatprep.subr.mxu0 0.0
  %48 = vmatpush1.msra.mxu0 %v31
  %49 = vmatprep.subr.mxu0 0.0
  %50 = vmatpush1.msra.mxu0 %v30
  %51 = vmatprep.subr.mxu0 0.0
  %52 = vmatpush1.msra.mxu0 %v29
  %53 = vmatprep.subr.mxu0 0.0
  %54 = vmatpush1.msra.mxu0 %v28
  %55 = vmatprep.subr.mxu0 0.0
  %56 = vmatpush1.msra.mxu0 %v27
  %57 = vmatprep.subr.mxu0 0.0
  %58 = vmatpush1.msra.mxu0 %v26
  %59 = vmatprep.subr.mxu0 0.0
  %60 = vmatpush1.msra.mxu0 %v25
  %61 = vmatprep.subr.mxu0 0.0
  %62 = vmatpush1.msra.mxu0 %v24
  %63 = vmatprep.subr.mxu0 0.0
  %64 = vmatpush1.msra.mxu0 %v23
  %65 = vmatprep.subr.mxu0 0.0
  %66 = vmatpush1.msra.mxu0 %v22
  %67 = vmatprep.subr.mxu0 0.0
  %68 = vmatpush1.msra.mxu0 %v21
  %69 = vmatprep.subr.mxu0 0.0
  %70 = vmatpush2.msra.mxu0 0.0
  %71 = vmatprep.subr.mxu0 0.0
  %72 = vmatpush2.msra.mxu0 0.0
  %73 = vmatprep.subr.mxu0 0.0
  %74 = vmatpush2.msra.mxu0 0.0
  %75 = vmatprep.subr.mxu0 0.0
  %76 = vmatpush2.msra.mxu0 0.0
  %77 = vmatprep.subr.mxu0 0.0
  %78 = vmatpush2.msra.mxu0 0.0
  %79 = vmatprep.subr.mxu0 0.0
  %80 = vmatpush2.msra.mxu0 0.0
  %81 = vmatprep.subr.mxu0 0.0
  %82 = vmatpush2.msra.mxu0 0.0
  %83 = vmatprep.subr.mxu0 0.0
  %84 = vmatpush2.msra.mxu0 0.0
  %85 = vmatprep.subr.mxu0 0.0
  %86 = vmatpush2.msra.mxu0 0.0
  %87 = vmatprep.subr.mxu0 0.0
  %88 = vmatpush2.msra.mxu0 0.0
  %89 = vmatprep.subr.mxu0 0.0
  %90 = vmatpush2.msra.mxu0 0.0
  %91 = vmatprep.subr.mxu0 0.0
  %92 = vmatpush2.msra.mxu0 0.0
  %93 = vmatprep.subr.mxu0 0.0
  %94 = vmatpush2.msra.mxu0 0.0
  %95 = vmatprep.subr.mxu0 0.0
  %96 = vmatpush2.msra.mxu0 0.0
  %97 = vmatprep.subr.mxu0 0.0
  %98 = vmatpush2.msra.mxu0 0.0
  %99 = vmatprep.subr.mxu0 0.0
  %100 = vmatpush2.msra.mxu0 0.0
  %101 = vmatprep.mubr.f32.mxu0 0.0
  %102 = vmatmul.mubr.f32.gmra.mxu0 %v18
  %v103 = vpop.f32.mrf.mxu0
  %v104 = vadd.f32 0.0, %v103
  %v105 = vpop.f32.mrf.mxu0
  %106 = vdwg.mxu0
  %107 = vmatprep.subr.mxu0 0.0
  %108 = vmatpush1.msra.mxu0 %v36
  %109 = vmatprep.subr.mxu0 0.0
  %110 = vmatpush1.msra.mxu0 %v35
  %111 = vmatprep.subr.mxu0 0.0
  %112 = vmatpush1.msra.mxu0 %v34
  %113 = vmatprep.subr.mxu0 0.0
  %114 = vmatpush1.msra.mxu0 %v33
  %115 = vmatprep.subr.mxu0 0.0
  %116 = vmatpush1.msra.mxu0 %v32
  %117 = vmatprep.subr.mxu0 0.0
  %118 = vmatpush1.msra.mxu0 %v31
  %119 = vmatprep.subr.mxu0 0.0
  %120 = vmatpush1.msra.mxu0 %v30
  %121 = vmatprep.subr.mxu0 0.0
  %122 = vmatpush1.msra.mxu0 %v29
  %123 = vmatprep.subr.mxu0 0.0
  %124 = vmatpush1.msra.mxu0 %v28
  %125 = vmatprep.subr.mxu0 0.0
  %126 = vmatpush1.msra.mxu0 %v27
  %127 = vmatprep.subr.mxu0 0.0
  %128 = vmatpush1.msra.mxu0 %v26
  %129 = vmatprep.subr.mxu0 0.0
  %130 = vmatpush1.msra.mxu0 %v25
  %131 = vmatprep.subr.mxu0 0.0
  %132 = vmatpush1.msra.mxu0 %v24
  %133 = vmatprep.subr.mxu0 0.0
  %134 = vmatpush1.msra.mxu0 %v23
  %135 = vmatprep.subr.mxu0 0.0
  %136 = vmatpush1.msra.mxu0 %v22
  %137 = vmatprep.subr.mxu0 0.0
  %138 = vmatpush1.msra.mxu0 %v21
  %139 = vmatprep.subr.mxu0 0.0
  %140 = vmatpush2.msra.mxu0 0.0
  %141 = vmatprep.subr.mxu0 0.0
  %142 = vmatpush2.msra.mxu0 0.0
  %143 = vmatprep.subr.mxu0 0.0
  %144 = vmatpush2.msra.mxu0 0.0
  %145 = vmatprep.subr.mxu0 0.0
  %146 = vmatpush2.msra.mxu0 0.0
  %147 = vmatprep.subr.mxu0 0.0
  %148 = vmatpush2.msra.mxu0 0.0
  %149 = vmatprep.subr.mxu0 0.0
  %150 = vmatpush2.msra.mxu0 0.0
  %151 = vmatprep.subr.mxu0 0.0
  %152 = vmatpush2.msra.mxu0 0.0
  %153 = vmatprep.subr.mxu0 0.0
  %154 = vmatpush2.msra.mxu0 0.0
  %155 = vmatprep.subr.mxu0 0.0
  %156 = vmatpush2.msra.mxu0 0.0
  %157 = vmatprep.subr.mxu0 0.0
  %158 = vmatpush2.msra.mxu0 0.0
  %159 = vmatprep.subr.mxu0 0.0
  %160 = vmatpush2.msra.mxu0 0.0
  %161 = vmatprep.subr.mxu0 0.0
  %162 = vmatpush2.msra.mxu0 0.0
  %163 = vmatprep.subr.mxu0 0.0
  %164 = vmatpush2.msra.mxu0 0.0
  %165 = vmatprep.subr.mxu0 0.0
  %166 = vmatpush2.msra.mxu0 0.0
  %167 = vmatprep.subr.mxu0 0.0
  %168 = vmatpush2.msra.mxu0 0.0
  %169 = vmatprep.subr.mxu0 0.0
  %170 = vmatpush2.msra.mxu0 0.0
  %171 = vmatprep.mubr.f32.mxu0 0.0
  %172 = vmatmul.mubr.f32.gmra.mxu0 %v20
  %v173 = vpop.f32.mrf.mxu0
  %v174 = vadd.f32 0.0, %v173
  %v175 = vpop.f32.mrf.mxu0
  %176 = vdwg.mxu0
  %v177 = vmul.f32 %v104, 0.125
  %v178 = vmul.f32 %v174, 0.125
  %v179 = vmul.f32 %v177, %v177
  %v180 = vsub.f32 %v178, %v179
  %v181 = vadd.f32 %v180, 1e-05
  %v182 = vrsqrt.pop %v181
  %v183 = vld [vmem:[%s1] sm:$0x1]
  %v184 = vmul.f32 %v183, %v182
  %v185 = vld [vmem:[%s2] sm:$0x1]
  %v186 = vmul.f32 %v177, %v184
  %v187 = vsub.f32 %v185, %v186
  %v188 = vmul.f32 %v17, %v184
  %v189 = vadd.f32 %v188, %v187
  %190 = vst [vmem:[%s4] sm:$0x1] %v189
  // Predicated region
  $region18: #{_weave_bn_forward.3} parent=0 // pred_check
    _
  $region19: #{_weave_bn_forward.3} parent=0 // pred_check_branch
    %192 = sbr.rel (0) target = $region21
  $region20: #{_weave_bn_forward.3} parent=0 // pred_region
    _
  $region21: #{_weave_bn_forward.3} parent=0 // pred_fallthru
    _
  // Predicated region
  $region22: #{_weave_bn_forward.3} parent=0 // pred_check
    _
  $region23: #{_weave_bn_forward.3} parent=0 // pred_check_branch
    %194 = sbr.rel (0) target = $region25
  $region24: #{_weave_bn_forward.3} parent=0 // pred_region
    _
  $region25: #{_weave_bn_forward.3} parent=0 // pred_fallthru
    _

</llo_original>
